<compile_context>
chip_gen: v7x
topology: tpu7x:2x2x1
jax: 0.10.0
libtpu: 0.0.40
codegen_flags: <defaults>
</compile_context>

<pallas_src>
import jax
import jax.numpy as jnp
from jax.experimental import pallas as pl
from jax.experimental.pallas import tpu as pltpu


def _swish_kernel(x_ref, o_ref):
    x = x_ref[...]
    xf = x.astype(jnp.float32)            # no-op for f32; sigmoid is free EUP filler
    o_ref[...] = (xf * jax.nn.sigmoid(xf)).astype(o_ref.dtype)


def _swish_ref(x):
    """Plain-JAX swish (used for tiny tensors and the ragged tail)."""
    xf = x.astype(jnp.float32)
    return (xf * jax.nn.sigmoid(xf)).astype(x.dtype)


def _generation_config():
    """Best-effort TPU generation -> (block_bytes, vmem_limit_bytes, min_steps, core_parallel)."""
    kind = ""
    try:
        kind = jax.devices()[0].device_kind.lower()
    except Exception:
        pass
    if "v7" in kind:
        # 64 MiB physical VMEM per TC: 6 MiB blocks * 4 buffers = 24 MiB << 48 MiB limit.
        return 6 * 1024 * 1024, 48 * 1024 * 1024, 4, True
    if "v6" in kind:
        # 128 MiB physical: 8 MiB blocks * 4 = 32 MiB; raise scoped limit to 64 MiB.
        return 8 * 1024 * 1024, 64 * 1024 * 1024, 2, False
    if "v5" in kind:
        # 4 MiB blocks; lift the 16 MiB scoped default to leave headroom for scratch.
        return 4 * 1024 * 1024, 48 * 1024 * 1024, 2, False
    # Unknown generation: conservative (also safe against a 64 MiB physical VMEM).
    return 4 * 1024 * 1024, 48 * 1024 * 1024, 2, False


def _swish_pallas_2d(x2d, row_tile, dim_sems, vmem_limit_bytes, donate_input):
    rows, lane = x2d.shape
    n = rows * lane
    itemsize = jnp.dtype(x2d.dtype).itemsize
    extra = {}
    if donate_input:
        # Input/output shape+dtype are identical; aliasing halves peak HBM
        # footprint.  Only worthwhile when the caller actually donates the
        # buffer -- otherwise XLA inserts a defensive copy (extra traffic).
        extra["input_output_aliases"] = {0: 0}
    return pl.pallas_call(
        _swish_kernel,
        out_shape=jax.ShapeDtypeStruct((rows, lane), x2d.dtype),
        grid_spec=pltpu.PrefetchScalarGridSpec(
            num_scalar_prefetch=0,
            grid=(pl.cdiv(rows, row_tile),),
            in_specs=[pl.BlockSpec((row_tile, lane), lambda i: (i, 0))],
            out_specs=pl.BlockSpec((row_tile, lane), lambda i: (i, 0)),
        ),
        compiler_params=pltpu.CompilerParams(
            dimension_semantics=dim_sems,
            vmem_limit_bytes=vmem_limit_bytes,
        ),
        cost_estimate=pl.CostEstimate(
            flops=4 * n,
            transcendentals=n,
            bytes_accessed=2 * n * itemsize,
        ),
        **extra,
    )(x2d)


def swish(x, *, target_block_bytes=None, min_pallas_bytes=256 * 1024,
          donate_input=False):
    """Elementwise Swish. Accepts any shape; flattens to a lane-dense (rows, L) slab."""
    orig_shape = x.shape
    dtype = x.dtype
    n = x.size
    if n == 0:
        return x
    itemsize = jnp.dtype(dtype).itemsize

    # Tiny tensors: pallas_call fixed cost + custom-call boundary exceed the
    # work, and XLA will fuse the elementwise swish into neighbors for free.
    if n * itemsize < min_pallas_bytes:
        return _swish_ref(x)

    block_bytes, vmem_limit, min_steps, core_parallel = _generation_config()
    if target_block_bytes is not None:
        block_bytes = target_block_bytes

    # ---- split off a <128-element ragged tail (handled in plain jnp) so the
    # ---- bulk goes through the kernel with no pad/unpad HBM passes.
    tail_len = n % 128
    main_len = n - tail_len
    if main_len == 0:               # everything is tail (< 128 elements)
        return _swish_ref(x)
    x_flat = x.reshape(-1)
    x_main = x_flat[:main_len] if tail_len else x_flat

    # ---- lane-dense slab: widest lane count that divides the aligned prefix
    # ---- exactly (large multiple of 128 -> unmasked full-width stores).
    lane = 128
    for cand in (4096, 2048, 1024, 512, 256):
        if main_len % cand == 0:
            lane = cand
            break
    rows = main_len // lane
    x2d = x_main.reshape(rows, lane)

    # ---- row tile: ~block_bytes per block, sublane-aligned; keep >= min_steps
    # ---- grid steps when rows allow so the per-core DMA/compute pipeline has
    # ---- work to overlap (min_steps=4 on v7x -> >=2 steps per TensorCore).
    sub = 8 * max(1, 4 // itemsize)     # 8 rows f32, 16 bf16, 32 int8
    if rows <= sub:
        row_tile = rows                 # block == full array dims (always legal)
    else:
        target_rows = max(sub, block_bytes // (lane * itemsize))
        row_tile = min(target_rows, max(sub, rows // min_steps))
        row_tile = max(sub, (row_tile // sub) * sub)

    steps = pl.cdiv(rows, row_tile)
    core_par = getattr(pltpu, "CORE_PARALLEL", None)
    if core_parallel and core_par is not None and steps >= 2:
        dim_sems = (core_par,)          # shard the row axis across v7x's 2 TCs
    else:
        dim_sems = ("parallel",)

    try:
        out2d = _swish_pallas_2d(x2d, row_tile, dim_sems, vmem_limit, donate_input)
    except Exception:
        if dim_sems == ("parallel",):
            raise
        # CORE_PARALLEL fallback (eager path): retry with plain "parallel".
        out2d = _swish_pallas_2d(x2d, row_tile, ("parallel",), vmem_limit,
                                 donate_input)

    out_flat = out2d.reshape(-1)
    if tail_len:
        # TODO(synk): fold the tail into the kernel (pl.ANY input + bounded DMA
        # with a masked store) to also drop this final stitch pass.
        out_flat = jnp.concatenate([out_flat, _swish_ref(x_flat[main_len:])])
    return out_flat.reshape(orig_shape)


if __name__ == "__main__":
    key = jax.random.PRNGKey(0)
    k1, k2, k3 = jax.random.split(key, 3)

    # Canonical small shape from the module's elementwise forward.
    x = jax.random.normal(k1, (2, 4, 16, 16), dtype=jnp.float32)
    y = swish(x, min_pallas_bytes=0)      # force the Pallas path for the demo
    jax.block_until_ready(y)
    y_ref = x * jax.nn.sigmoid(x)
    assert y.shape == x.shape and y.dtype == x.dtype
    assert jnp.allclose(y, y_ref, atol=1e-6, rtol=1e-6)

    # Medium tensor: exercises the default (generation-aware) tiling path.
    x2 = jax.random.normal(k2, (256, 1024), dtype=jnp.float32)
    y2 = swish(x2)
    jax.block_until_ready(y2)
    assert jnp.allclose(y2, x2 * jax.nn.sigmoid(x2), atol=1e-6, rtol=1e-6)

    # Ragged size (not a multiple of 128): prefix kernel + jnp tail, no pad pass.
    x3 = jax.random.normal(k3, (5, 1000), dtype=jnp.float32)
    y3 = swish(x3, min_pallas_bytes=0)
    jax.block_until_ready(y3)
    assert jnp.allclose(y3, x3 * jax.nn.sigmoid(x3), atol=1e-6, rtol=1e-6)

    print("KERNEL_OK")
</pallas_src>

<mosaic_0001>
module attributes {stable_mosaic.version = 11 : i64} {
  func.func @_swish_kernel(%arg0: i32, %arg1: memref<1x2048xf32, #tpu.memory_space<vmem>>, %arg2: memref<1x2048xf32, #tpu.memory_space<vmem>>) attributes {dimension_semantics = [#tpu.dimension_semantics<parallel>], iteration_bounds = array<i64: 1>, scalar_prefetch = 0 : i64, scratch_operands = 0 : i64, tpu.core_type = #tpu.core_type<tc>, window_params = [{transform_indices = @transform_0, window_bounds = array<i64: 1, 2048>}, {transform_indices = @transform_1, window_bounds = array<i64: 1, 2048>}]} {
    %c0 = arith.constant 0 : index
    %c0_0 = arith.constant 0 : index
    %0 = vector.load %arg1[%c0, %c0_0] : memref<1x2048xf32, #tpu.memory_space<vmem>>, vector<1x2048xf32>
    %1 = arith.negf %0 : vector<1x2048xf32>
    %2 = math.exp %1 : vector<1x2048xf32>
    %cst = arith.constant 1.000000e+00 : f32
    %3 = vector.broadcast %cst : f32 to vector<1x2048xf32>
    %4 = arith.addf %3, %2 : vector<1x2048xf32>
    %5 = arith.divf %3, %4 : vector<1x2048xf32>
    %6 = arith.mulf %0, %5 : vector<1x2048xf32>
    %c0_1 = arith.constant 0 : index
    %c0_2 = arith.constant 0 : index
    %7 = vector.load %arg2[%c0_1, %c0_2] : memref<1x2048xf32, #tpu.memory_space<vmem>>, vector<1x2048xf32>
    tpu.vector_store %arg2[%c0_1, %c0_2], %6 {strides = array<i32>} : memref<1x2048xf32, #tpu.memory_space<vmem>>, vector<1x2048xf32>,
    return
  }
  func.func @transform_0(%arg0: i32) -> (i32, i32) {
    %c0_i32 = arith.constant 0 : i32
    %c0_i32_0 = arith.constant 0 : i32
    return %arg0, %c0_i32 : i32, i32
  }
  func.func @transform_1(%arg0: i32) -> (i32, i32) {
    %c0_i32 = arith.constant 0 : i32
    %c0_i32_0 = arith.constant 0 : i32
    return %arg0, %c0_i32 : i32, i32
  }
}

</mosaic_0001>

<llo_original>
// kernel: tpu_custom_call.1
$region0: #{tpu_custom_call.1}
  #allocation0 [shape = 'u32[]', space=smem, size = 0x4, offset = 0x4, fixed_abs, tag = 'smem constant byte address 0x4 - core index']
  #allocation1 [shape = 'u32[144,128]{1,0:T(1,128)}', space=vmem, size = 0x12000, scoped, tag = 'internal scratch']
  %s0 = inlined_call_operand.hbm [shape: f32[1,2048], index: 0, kind: input, shape index: {}]
  %s1 = inlined_call_operand.hbm [shape: f32[1,2048], index: 1, kind: output, shape index: {}]
  %s2 = sld [smem:[#allocation0]]
  $region18: #{tpu_custom_call.1} parent=0
    _
  %s4 = ssub.s32 1, %s2
  %s5 = scalar_select 0, %s4, %s2
  $region1: #{tpu_custom_call.1} parent=0
    #allocation2 [shape = 'u8[8192]{0}', space=vmem, size = 0x2000, scoped, tag = 'input window, operand 0, single buffered']
    #allocation3 [shape = 's32[1]{0}', space=sflag, size = 0x4, scoped, tag = 'scoped memory for tpu_custom_call.1']
    #allocation4 [shape = 's32[1]{0}', space=sflag, size = 0x4, scoped, tag = 'scoped memory for tpu_custom_call.1']
    #allocation5 [shape = 'u8[8192]{0}', space=vmem, size = 0x2000, scoped, tag = 'output window, operand 0, single buffered']
    %6 = vsyncpa [#allocation3], 0
    %7 = vsyncpa [#allocation4], 0
    // Predicated region
    $region2: #{tpu_custom_call.1} parent=1 // pred_check
      _
    $region3: #{tpu_custom_call.1} parent=1 // pred_check_branch
      %9 = sbr.rel (0) target = $region5
    $region4: #{tpu_custom_call.1} parent=1 // pred_region
      %s11 = ssub.s32 256, 256
      %12 = vsyncadd [#allocation3], %s11
      %s14 = sshll.u32 [#allocation2], 4
      %s15 = int_to_ptr.vmem [resolvable:$true] %s14
      %17 = dma.hbm_to_vmem [thread:$0]  %s0, 256, %s15, [#allocation3]
    $region5: #{tpu_custom_call.1} parent=1 // pred_fallthru
      _
    // Predicated region
    $region6: #{tpu_custom_call.1} parent=1 // pred_check
      _
    $region7: #{tpu_custom_call.1} parent=1 // pred_check_branch
      %19 = sbr.rel (0) target = $region9
    $region8: #{tpu_custom_call.1} parent=1 // pred_region
      %20 = dma.done [#allocation3], 256
    $region9: #{tpu_custom_call.1} parent=1 // pred_fallthru
      _
    %v21 = vld [vmem:[#allocation2] sm:$0xff]
    %v22 = vld [vmem:[#allocation2 + $0x8] sm:$0xff]
    %v23 = vxor.u32 %v21, 2147483648
    %v24 = vxor.u32 %v22, 2147483648
    %v25 = vmul.f32 %v23, 1.442695
    %v26 = vpow.pop %v25
    %v27 = vmul.f32 %v24, 1.442695
    %v28 = vpow.pop %v27
    %v29 = vadd.f32 %v26, 1.0
    %v30 = vadd.f32 %v28, 1.0
    %v31 = vrcp.pop %v29
    %v32 = vmul.f32 1.0, %v31
    %v33 = vrcp.pop %v30
    %v34 = vmul.f32 1.0, %v33
    %v35 = vmul.f32 %v21, %v32
    %v36 = vmul.f32 %v22, %v34
    %37 = vst [vmem:[#allocation5] sm:$0xff] %v35
    %38 = vst [vmem:[#allocation5 + $0x8] sm:$0xff] %v36
    // Predicated region
    $region10: #{tpu_custom_call.1} parent=1 // pred_check
      _
    $region11: #{tpu_custom_call.1} parent=1 // pred_check_branch
      %40 = sbr.rel (0) target = $region13
    $region12: #{tpu_custom_call.1} parent=1 // pred_region
      %s42 = ssub.s32 256, 256
      %43 = vsyncadd [#allocation4], %s42
      %s45 = sshll.u32 [#allocation5], 4
      %s46 = int_to_ptr.vmem [resolvable:$true] %s45
      %48 = dma.vmem_to_hbm [thread:$0]  %s46, 256, %s1, [#allocation4]
    $region13: #{tpu_custom_call.1} parent=1 // pred_fallthru
      _
    // Predicated region
    $region14: #{tpu_custom_call.1} parent=1 // pred_check
      _
    $region15: #{tpu_custom_call.1} parent=1 // pred_check_branch
      %50 = sbr.rel (0) target = $region17
    $region16: #{tpu_custom_call.1} parent=1 // pred_region
      %51 = dma.done [#allocation4], 256
    $region17: #{tpu_custom_call.1} parent=1 // pred_fallthru
      _
    %52 = vsyncpa [#allocation3], 1
    %53 = vsyncpa [#allocation4], 1

</llo_original>
